<compile_context>
chip_gen: v7x
topology: tpu7x:2x2x1
jax: 0.10.0
libtpu: 0.0.40
codegen_flags: <defaults>
</compile_context>

<pallas_src>
import math

import jax
import jax.numpy as jnp
from jax.experimental import pallas as pl
from jax.experimental.pallas import tpu as pltpu


def _build_pe(max_len: int, d_model: int) -> jnp.ndarray:
    """Sinusoidal positional-encoding table [max_len, d_model] — identical to the torch
    buffer after squeezing its size-1 broadcast axis."""
    position = jnp.arange(max_len, dtype=jnp.float32)[:, None]                    # [L, 1]
    div_term = jnp.exp(
        jnp.arange(0, d_model, 2, dtype=jnp.float32) * (-math.log(10000.0) / d_model)
    )                                                                              # [D/2]
    ang = position * div_term                                                      # [L, D/2]
    # interleave: even cols = sin, odd cols = cos
    pe = jnp.stack([jnp.sin(ang), jnp.cos(ang)], axis=-1).reshape(max_len, d_model)
    return pe


# -----------------------------------------------------------------------------------------
# Kernels: pure streaming elementwise.  jnp broadcasting covers both layouts:
#   3-D path : x (ts, B, D)  + pe (ts, 1, D)    (sublane broadcast over batch)
#   flat path: x (ts, B*D)   + pe (ts, B*D)     (pe pre-broadcast in the wrapper)
# -----------------------------------------------------------------------------------------
def _add_pe_kernel(x_ref, pe_ref, o_ref):
    o_ref[...] = x_ref[...] + pe_ref[...]


def _add_pe_dropout_kernel(x_ref, pe_ref, m_ref, o_ref):
    # m is the pre-scaled keep multiplier: 0 (dropped) or 1/(1-p) (kept).
    o_ref[...] = (x_ref[...] + pe_ref[...]) * m_ref[...]


def _sublane_multiple(itemsize: int) -> int:
    # f32 -> 8 sublanes, bf16 -> 16 (2 rows/sublane), int8/fp8 -> 32.
    return {4: 8, 2: 16, 1: 32}.get(itemsize, 8)


def _pick_tile_rows(S: int, row_bytes: int, itemsize: int) -> int:
    """Rows per grid step: maximize tile size under a conservative double-buffered budget."""
    # 12 MiB of double-buffered BlockSpec tiles leaves headroom for in-kernel intermediates
    # under the default scoped-VMEM limit on every generation (16 MiB v5e, 32 MiB v6e/v7x),
    # and keeps per-step DMA in the multi-MiB range so the ~0.35 us step overhead is hidden.
    vmem_budget = 12 * 1024 * 1024
    ts = max(1, vmem_budget // max(row_bytes, 1))
    if ts >= S:
        return S                         # one full block: no alignment constraint needed
    mult = _sublane_multiple(itemsize)
    ts = max(mult, (ts // mult) * mult)  # dtype-aware sublane rounding (down, stays in budget)
    return min(ts, S)


def positional_encoding(
    x: jnp.ndarray,
    pe_table: jnp.ndarray,
    *,
    p: float = 0.1,
    training: bool = False,
    seed: int = 0,
) -> jnp.ndarray:
    """x: [seq_len, batch, d_model] -> same shape (matches the PyTorch module's forward)."""
    S, B, D = x.shape
    max_len, d_model = pe_table.shape
    assert D == d_model and S <= max_len

    dtype = x.dtype
    itemsize = jnp.dtype(dtype).itemsize
    use_dropout = bool(training) and float(p) > 0.0
    lane_dense = (D % 128) == 0

    mask = None
    if use_dropout:
        # Inverted dropout, mask built once in the wrapper (portable: no TPU-only PRNG in
        # the kernel) and pre-scaled so the kernel only does one multiply.
        keep_prob = max(0.0, 1.0 - float(p))
        scale = (1.0 / keep_prob) if keep_prob > 0.0 else 0.0   # p >= 1.0 -> all zeros
        keep = jax.random.bernoulli(jax.random.PRNGKey(seed), keep_prob, (S, B, D))
        mask = keep.astype(dtype) * jnp.asarray(scale, dtype)

    if lane_dense:
        # 3-D blocks; pe broadcast over the batch (sublane) axis inside the kernel.
        pe_in = pe_table.astype(dtype)[:, None, :]                       # [max_len, 1, D]
        n_streams = 3 if use_dropout else 2                              # x, out, (mask)
        row_bytes = B * D * itemsize * 2 * n_streams + D * itemsize * 2  # + pe tile
        ts = _pick_tile_rows(S, row_bytes, itemsize)
        grid = (pl.cdiv(S, ts),)
        xo_spec = pl.BlockSpec((ts, B, D), lambda s: (s, 0, 0))
        pe_spec = pl.BlockSpec((ts, 1, D), lambda s: (s, 0, 0))
        inputs = [x, pe_in]
        in_specs = [xo_spec, pe_spec]
        if use_dropout:
            inputs.append(mask)
            in_specs.append(xo_spec)
        out_spec = xo_spec
        out_shape = jax.ShapeDtypeStruct((S, B, D), dtype)
        pe_bytes = S * D * itemsize
    else:
        # Lane-sparse d_model: flat [S, B*D] layout; pe pre-broadcast once in the wrapper.
        BD = B * D
        x_in = x.reshape(S, BD)
        pe_in = jnp.broadcast_to(
            pe_table[:S].astype(dtype)[:, None, :], (S, B, D)
        ).reshape(S, BD)
        n_streams = 4 if use_dropout else 3                              # x, pe, out, (mask)
        row_bytes = BD * itemsize * 2 * n_streams
        ts = _pick_tile_rows(S, row_bytes, itemsize)
        grid = (pl.cdiv(S, ts),)
        xo_spec = pl.BlockSpec((ts, BD), lambda s: (s, 0))
        inputs = [x_in, pe_in]
        in_specs = [xo_spec, xo_spec]
        if use_dropout:
            inputs.append(mask.reshape(S, BD))
            in_specs.append(xo_spec)
        out_spec = xo_spec
        out_shape = jax.ShapeDtypeStruct((S, BD), dtype)
        pe_bytes = S * BD * itemsize

    elems = S * B * D
    cost = pl.CostEstimate(
        flops=elems * (2 if use_dropout else 1),
        transcendentals=0,
        bytes_accessed=2 * elems * itemsize + pe_bytes
        + (elems * itemsize if use_dropout else 0),
    )

    kernel = _add_pe_dropout_kernel if use_dropout else _add_pe_kernel
    out = pl.pallas_call(
        kernel,
        out_shape=out_shape,
        grid=grid,
        in_specs=in_specs,
        out_specs=out_spec,
        compiler_params=pltpu.CompilerParams(dimension_semantics=("parallel",)),
        cost_estimate=cost,
    )(*inputs)

    return out.reshape(S, B, D)


if __name__ == "__main__":
    # Small, module-consistent shapes: seq=8, batch=2, d_model=32, max_len=5000.
    SEQ, BATCH, D_MODEL, MAX_LEN = 8, 2, 32, 5000

    key = jax.random.PRNGKey(0)
    x = jax.random.normal(key, (SEQ, BATCH, D_MODEL), dtype=jnp.float32)
    pe_table = _build_pe(MAX_LEN, D_MODEL)

    # Eval-mode forward (dropout == identity) vs. pure-JAX reference.
    out = positional_encoding(x, pe_table, p=0.1, training=False)
    out = jax.block_until_ready(out)
    ref = x + pe_table[:SEQ][:, None, :]
    assert out.shape == (SEQ, BATCH, D_MODEL)
    assert jnp.allclose(out, ref, atol=1e-6, rtol=1e-6)

    # Training-mode forward: every element must be either 0 (dropped) or ref/(1-p) (kept).
    # The mask comes from jax.random, so it will not bit-match torch.nn.Dropout's RNG
    # stream, but the semantics (inverted dropout) are identical.
    p = 0.1
    out_train = positional_encoding(x, pe_table, p=p, training=True, seed=1234)
    out_train = jax.block_until_ready(out_train)
    scaled = ref / (1.0 - p)
    ok = jnp.logical_or(
        jnp.isclose(out_train, 0.0, atol=1e-6),
        jnp.isclose(out_train, scaled, atol=1e-5, rtol=1e-3),
    )
    assert bool(jnp.all(ok))

    print("KERNEL_OK")
</pallas_src>

<mosaic_0001>
module attributes {stable_mosaic.version = 11 : i64} {
  func.func @_add_pe_kernel(%arg0: i32, %arg1: memref<8x64xf32, #tpu.memory_space<vmem>>, %arg2: memref<8x64xf32, #tpu.memory_space<vmem>>, %arg3: memref<8x64xf32, #tpu.memory_space<vmem>>) attributes {dimension_semantics = [#tpu.dimension_semantics<parallel>], iteration_bounds = array<i64: 1>, scalar_prefetch = 0 : i64, scratch_operands = 0 : i64, tpu.core_type = #tpu.core_type<tc>, window_params = [{transform_indices = @transform_0, window_bounds = array<i64: 8, 64>}, {transform_indices = @transform_1, window_bounds = array<i64: 8, 64>}, {transform_indices = @transform_2, window_bounds = array<i64: 8, 64>}]} {
    %c0 = arith.constant 0 : index
    %c0_0 = arith.constant 0 : index
    %0 = vector.load %arg1[%c0, %c0_0] : memref<8x64xf32, #tpu.memory_space<vmem>>, vector<8x64xf32>
    %c0_1 = arith.constant 0 : index
    %c0_2 = arith.constant 0 : index
    %1 = vector.load %arg2[%c0_1, %c0_2] : memref<8x64xf32, #tpu.memory_space<vmem>>, vector<8x64xf32>
    %2 = arith.addf %0, %1 : vector<8x64xf32>
    %c0_3 = arith.constant 0 : index
    %c0_4 = arith.constant 0 : index
    %3 = vector.load %arg3[%c0_3, %c0_4] : memref<8x64xf32, #tpu.memory_space<vmem>>, vector<8x64xf32>
    tpu.vector_store %arg3[%c0_3, %c0_4], %2 {strides = array<i32>} : memref<8x64xf32, #tpu.memory_space<vmem>>, vector<8x64xf32>,
    return
  }
  func.func @transform_0(%arg0: i32) -> (i32, i32) {
    %c0_i32 = arith.constant 0 : i32
    %c0_i32_0 = arith.constant 0 : i32
    return %arg0, %c0_i32 : i32, i32
  }
  func.func @transform_1(%arg0: i32) -> (i32, i32) {
    %c0_i32 = arith.constant 0 : i32
    %c0_i32_0 = arith.constant 0 : i32
    return %arg0, %c0_i32 : i32, i32
  }
  func.func @transform_2(%arg0: i32) -> (i32, i32) {
    %c0_i32 = arith.constant 0 : i32
    %c0_i32_0 = arith.constant 0 : i32
    return %arg0, %c0_i32 : i32, i32
  }
}

</mosaic_0001>

<llo_original>
// kernel: tpu_custom_call.1
$region0: #{tpu_custom_call.1}
  #allocation0 [shape = 'u32[]', space=smem, size = 0x4, offset = 0x4, fixed_abs, tag = 'smem constant byte address 0x4 - core index']
  #allocation1 [shape = 'u32[144,128]{1,0:T(1,128)}', space=vmem, size = 0x12000, scoped, tag = 'internal scratch']
  %s0 = inlined_call_operand.hbm [shape: f32[8,64], index: 0, kind: input, shape index: {}]
  %s1 = inlined_call_operand.hbm [shape: f32[8,64], index: 1, kind: input, shape index: {}]
  %s2 = inlined_call_operand.hbm [shape: f32[8,64], index: 2, kind: output, shape index: {}]
  %s3 = sld [smem:[#allocation0]]
  $region26: #{tpu_custom_call.1} parent=0
    _
  %s5 = ssub.s32 1, %s3
  %s6 = scalar_select 0, %s5, %s3
  $region1: #{tpu_custom_call.1} parent=0
    #allocation2 [shape = 'u8[4096]{0}', space=vmem, size = 0x1000, scoped, tag = 'input window, operand 0, single buffered']
    #allocation3 [shape = 's32[1]{0}', space=sflag, size = 0x4, scoped, tag = 'scoped memory for tpu_custom_call.1']
    #allocation4 [shape = 's32[1]{0}', space=sflag, size = 0x4, scoped, tag = 'scoped memory for tpu_custom_call.1']
    #allocation5 [shape = 'u8[4096]{0}', space=vmem, size = 0x1000, scoped, tag = 'input window, operand 1, single buffered']
    #allocation6 [shape = 's32[1]{0}', space=sflag, size = 0x4, scoped, tag = 'scoped memory for tpu_custom_call.1']
    #allocation7 [shape = 'u8[4096]{0}', space=vmem, size = 0x1000, scoped, tag = 'output window, operand 0, single buffered']
    %7 = vsyncpa [#allocation3], 0
    %8 = vsyncpa [#allocation6], 0
    %9 = vsyncpa [#allocation4], 0
    // Predicated region
    $region2: #{tpu_custom_call.1} parent=1 // pred_check
      _
    $region3: #{tpu_custom_call.1} parent=1 // pred_check_branch
      %11 = sbr.rel (0) target = $region5
    $region4: #{tpu_custom_call.1} parent=1 // pred_region
      %s13 = ssub.s32 128, 128
      %14 = vsyncadd [#allocation3], %s13
      %s16 = sshll.u32 [#allocation2], 4
      %s17 = int_to_ptr.vmem [resolvable:$true] %s16
      %19 = dma.hbm_to_vmem [thread:$0]  %s0, 128, %s17, [#allocation3]
    $region5: #{tpu_custom_call.1} parent=1 // pred_fallthru
      _
    // Predicated region
    $region6: #{tpu_custom_call.1} parent=1 // pred_check
      _
    $region7: #{tpu_custom_call.1} parent=1 // pred_check_branch
      %21 = sbr.rel (0) target = $region9
    $region8: #{tpu_custom_call.1} parent=1 // pred_region
      %s23 = ssub.s32 128, 128
      %24 = vsyncadd [#allocation6], %s23
      %s26 = sshll.u32 [#allocation5], 4
      %s27 = int_to_ptr.vmem [resolvable:$true] %s26
      %29 = dma.hbm_to_vmem [thread:$0]  %s1, 128, %s27, [#allocation6]
    $region9: #{tpu_custom_call.1} parent=1 // pred_fallthru
      _
    // Predicated region
    $region10: #{tpu_custom_call.1} parent=1 // pred_check
      _
    $region11: #{tpu_custom_call.1} parent=1 // pred_check_branch
      %31 = sbr.rel (0) target = $region13
    $region12: #{tpu_custom_call.1} parent=1 // pred_region
      %32 = dma.done [#allocation3], 128
    $region13: #{tpu_custom_call.1} parent=1 // pred_fallthru
      _
    // Predicated region
    $region14: #{tpu_custom_call.1} parent=1 // pred_check
      _
    $region15: #{tpu_custom_call.1} parent=1 // pred_check_branch
      %34 = sbr.rel (0) target = $region17
    $region16: #{tpu_custom_call.1} parent=1 // pred_region
      %35 = dma.done [#allocation6], 128
    $region17: #{tpu_custom_call.1} parent=1 // pred_fallthru
      _
    %v36 = vld [vmem:[#allocation2] sm:$0xff]
    %v37 = vld [vmem:[#allocation5] sm:$0xff]
    %v38 = vadd.f32 %v36, %v37
    %vm39 = vcmask 523264
    %40 = vst.msk [vmem:[#allocation7] sm:$0xff] %vm39, %v38
    // Predicated region
    $region18: #{tpu_custom_call.1} parent=1 // pred_check
      _
    $region19: #{tpu_custom_call.1} parent=1 // pred_check_branch
      %42 = sbr.rel (0) target = $region21
    $region20: #{tpu_custom_call.1} parent=1 // pred_region
      %s44 = ssub.s32 128, 128
      %45 = vsyncadd [#allocation4], %s44
      %s47 = sshll.u32 [#allocation7], 4
      %s48 = int_to_ptr.vmem [resolvable:$true] %s47
      %50 = dma.vmem_to_hbm [thread:$0]  %s48, 128, %s2, [#allocation4]
    $region21: #{tpu_custom_call.1} parent=1 // pred_fallthru
      _
    // Predicated region
    $region22: #{tpu_custom_call.1} parent=1 // pred_check
      _
    $region23: #{tpu_custom_call.1} parent=1 // pred_check_branch
      %52 = sbr.rel (0) target = $region25
    $region24: #{tpu_custom_call.1} parent=1 // pred_region
      %53 = dma.done [#allocation4], 128
    $region25: #{tpu_custom_call.1} parent=1 // pred_fallthru
      _
    %54 = vsyncpa [#allocation3], 1
    %55 = vsyncpa [#allocation6], 1
    %56 = vsyncpa [#allocation4], 1

</llo_original>
